<compile_context>
chip_gen: v7x
topology: tpu7x:2x2x1
jax: 0.10.0
libtpu: 0.0.40
codegen_flags: <defaults>
</compile_context>

<pallas_src>
import functools

import jax
import jax.numpy as jnp
from jax.experimental import pallas as pl
from jax.experimental.pallas import tpu as pltpu

# Module constants (from Ynet.__init__)
CIN, COUT, KH, KW = 3, 6, 3, 3
COUT_PAD = 8                     # COUT padded to a full sublane group
N_TAPS = KH * KW * CIN           # 27
W_COLS = 32                      # 27 tap cols + 1 bias col, padded to 32 lanes
SHIFT_PAD = 128                  # >= max flattened tap shift, keeps widths %128==0
MAX_IMGS_PER_TILE = 8            # keeps the fully unrolled accumulator in vregs


def _conv2d_kernel(x_ref, w_ref, o_ref, *, width, img_w):
    """One batch tile of the valid 3x3 conv, evaluated at every lane position.

    x_ref: (CIN, width + SHIFT_PAD) f32 VMEM -- batch-fused, lane-flattened,
           zero-padded images (one 384-lane slab per image).
    w_ref: (COUT_PAD, W_COLS) f32 VMEM -- col r (r < 27) = tap-r weights for all
           out channels (kh, kw, ci tap order), col 27 = bias, rest zero.
    o_ref: (COUT_PAD, width) -- conv value at every lane position (pad rows and
           out-of-window lanes hold garbage; the wrapper discards them).
    """
    x = x_ref[...]                                    # (CIN, width + SHIFT_PAD)
    w = w_ref[...]                                    # (COUT_PAD, W_COLS)

    # Bias-initialised, sublane-packed accumulator: one vector MAC per tap below.
    acc = jnp.broadcast_to(w[:, N_TAPS:N_TAPS + 1], (COUT_PAD, width))

    r = 0
    for kh in range(KH):
        for kw in range(KW):
            s = kh * img_w + kw                       # flattened tap shift
            # Shifted planes for all channels of the whole batch tile
            # (static lane slice; pltpu.roll -> XLU is a possible alternative).
            xs = x[:, s:s + width]                    # (CIN, width)
            for ci in range(CIN):
                # (COUT_PAD,1) weight column x (1,width) plane: VPU outer-product
                # MAC on the full sublane-packed accumulator.
                acc = acc + w[:, r:r + 1] * xs[ci:ci + 1, :]
                r += 1

    o_ref[...] = acc.astype(o_ref.dtype)              # single unmasked slab store


def _pick_batch_tile(n):
    bt = min(n, MAX_IMGS_PER_TILE)
    while n % bt:
        bt -= 1
    return bt


def ynet_forward(x_nchw, w_oihw, bias):
    """Equivalent of Ynet.forward: Conv2d(3->6, k=3, s=1, p=0), NCHW in/out.

    x_nchw: (N, 3, H, W);  w_oihw: (6, 3, 3, 3) OIHW;  bias: (6,)
    returns (N, 6, H-2, W-2)
    """
    N, C, H, Wd = x_nchw.shape
    assert C == CIN
    Hout, Wout = H - KH + 1, Wd - KW + 1
    HW = H * Wd
    max_shift = (KH - 1) * Wd + (KW - 1)
    assert max_shift <= SHIFT_PAD
    # Per-image lane slab: HW data lanes + shift slack, rounded up to 128 lanes.
    lw = ((HW + max_shift + 127) // 128) * 128

    bt = _pick_batch_tile(N)        # images fused into the lane axis per step
    nt = N // bt
    width = bt * lw                 # lane-dense compute / store width per step
    tot_w = width + SHIFT_PAD

    # ---- layout glue (tiny, no HxW transposes) ------------------------------
    # Images -> (nt, CIN, bt*lw) lane slabs, zero-padded for the tap shifts.
    xf = jnp.pad(x_nchw.reshape(N, CIN, HW), ((0, 0), (0, 0), (0, lw - HW)))
    xf = xf.reshape(nt, bt, CIN, lw).transpose(0, 2, 1, 3).reshape(nt, CIN, width)
    xf = jnp.pad(xf, ((0, 0), (0, 0), (0, SHIFT_PAD)))
    # Weights -> (8, 32) VMEM tile: col r = tap r in (kh, kw, ci) order, col 27 = bias.
    w_taps = jnp.transpose(w_oihw, (0, 2, 3, 1)).reshape(COUT, N_TAPS)
    w_aug = jnp.concatenate([w_taps, bias.reshape(COUT, 1)], axis=1)
    w_aug = jnp.pad(w_aug, ((0, COUT_PAD - COUT), (0, W_COLS - (N_TAPS + 1))))

    kernel = functools.partial(_conv2d_kernel, width=width, img_w=Wd)

    out = pl.pallas_call(
        kernel,
        out_shape=jax.ShapeDtypeStruct((nt, COUT_PAD, width), x_nchw.dtype),
        grid=(nt,),
        in_specs=[
            pl.BlockSpec((None, CIN, tot_w), lambda t: (t, 0, 0)),
            pl.BlockSpec((COUT_PAD, W_COLS), lambda t: (0, 0)),
        ],
        out_specs=pl.BlockSpec((None, COUT_PAD, width), lambda t: (t, 0, 0)),
        compiler_params=pltpu.CompilerParams(
            # Parallel batch-tile axis: ~2x on v7x (2 TCs), harmless on v5e/v6e.
            # Per-step VMEM here is tens of KiB, far below v7x's 64 MiB even
            # when double-buffered; limit set explicitly (safe on all gens).
            dimension_semantics=("parallel",),
            vmem_limit_bytes=32 * 1024 * 1024,
        ),
    )(xf, w_aug)

    # TODO(synk): for very large N, stream lane-chunks through a VMEM scratch
    # (pltpu.emit_pipeline) instead of the fully unrolled in-register tile, and
    # size multi-MiB double-buffered blocks against v7x's 64 MiB VMEM.

    # Discard pad rows / garbage lanes and restore NCHW (all tiny XLA ops).
    out = out[:, :COUT, :].reshape(nt, COUT, bt, lw)[..., :HW]
    out = out.reshape(nt, COUT, bt, H, Wd)[..., :Hout, :Wout]
    return out.transpose(0, 2, 1, 3, 4).reshape(N, COUT, Hout, Wout)


if __name__ == "__main__":
    key = jax.random.PRNGKey(0)
    k_x, k_w, k_b = jax.random.split(key, 3)

    # Small, module-consistent shapes: batch=2, in_channels=3 (fixed), spatial=16.
    N, H, Wd = 2, 16, 16
    x = jax.random.normal(k_x, (N, CIN, H, Wd), dtype=jnp.float32)

    # Deterministic parameter init (PyTorch-style uniform(-1/sqrt(fan_in), +)).
    fan_in = CIN * KH * KW
    bound = 1.0 / (fan_in ** 0.5)
    w = jax.random.uniform(k_w, (COUT, CIN, KH, KW), jnp.float32, -bound, bound)
    b = jax.random.uniform(k_b, (COUT,), jnp.float32, -bound, bound)

    out = jax.block_until_ready(ynet_forward(x, w, b))

    # Correctness check against XLA's conv (same semantics as nn.Conv2d).
    ref = jax.lax.conv_general_dilated(
        x, w, window_strides=(1, 1), padding="VALID",
        dimension_numbers=("NCHW", "OIHW", "NCHW")) + b.reshape(1, COUT, 1, 1)
    assert out.shape == (N, COUT, H - 2, Wd - 2)
    assert jnp.allclose(out, ref, atol=1e-4, rtol=1e-4)

    print("KERNEL_OK")
</pallas_src>

<mosaic_0001>
module attributes {stable_mosaic.version = 11 : i64} {
  func.func @_conv2d_kernel(%arg0: i32, %arg1: memref<1x3x896xf32, #tpu.memory_space<vmem>>, %arg2: memref<8x32xf32, #tpu.memory_space<vmem>>, %arg3: memref<1x8x768xf32, #tpu.memory_space<vmem>>) attributes {dimension_semantics = [#tpu.dimension_semantics<parallel>], iteration_bounds = array<i64: 1>, scalar_prefetch = 0 : i64, scratch_operands = 0 : i64, tpu.core_type = #tpu.core_type<tc>, window_params = [{transform_indices = @transform_0, window_bounds = array<i64: 1, 3, 896>}, {pipeline_mode = #tpu.pipeline_mode<synchronous>, transform_indices = @transform_1, window_bounds = array<i64: 8, 32>}, {transform_indices = @transform_2, window_bounds = array<i64: 1, 8, 768>}]} {
    %c0 = arith.constant 0 : index
    %c0_0 = arith.constant 0 : index
    %c0_1 = arith.constant 0 : index
    %0 = vector.load %arg1[%c0, %c0_0, %c0_1] : memref<1x3x896xf32, #tpu.memory_space<vmem>>, vector<1x3x896xf32>
    %1 = vector.shape_cast %0 : vector<1x3x896xf32> to vector<3x896xf32>
    %c0_2 = arith.constant 0 : index
    %c0_3 = arith.constant 0 : index
    %2 = vector.load %arg2[%c0_2, %c0_3] : memref<8x32xf32, #tpu.memory_space<vmem>>, vector<8x32xf32>
    %3 = vector.extract_strided_slice %2 {offsets = [0, 27], sizes = [8, 1], strides = [1, 1]} : vector<8x32xf32> to vector<8x1xf32>
    %4 = vector.shape_cast %3 : vector<8x1xf32> to vector<8x1xf32>
    %5 = vector.broadcast %4 : vector<8x1xf32> to vector<8x768xf32>
    %6 = vector.extract_strided_slice %1 {offsets = [0, 0], sizes = [3, 768], strides = [1, 1]} : vector<3x896xf32> to vector<3x768xf32>
    %7 = vector.extract_strided_slice %2 {offsets = [0, 0], sizes = [8, 1], strides = [1, 1]} : vector<8x32xf32> to vector<8x1xf32>
    %8 = vector.extract_strided_slice %6 {offsets = [0, 0], sizes = [1, 768], strides = [1, 1]} : vector<3x768xf32> to vector<1x768xf32>
    %9 = vector.broadcast %7 : vector<8x1xf32> to vector<8x768xf32>
    %10 = vector.broadcast %8 : vector<1x768xf32> to vector<8x768xf32>
    %11 = arith.mulf %9, %10 : vector<8x768xf32>
    %12 = arith.addf %5, %11 : vector<8x768xf32>
    %13 = vector.extract_strided_slice %2 {offsets = [0, 1], sizes = [8, 1], strides = [1, 1]} : vector<8x32xf32> to vector<8x1xf32>
    %14 = vector.extract_strided_slice %6 {offsets = [1, 0], sizes = [1, 768], strides = [1, 1]} : vector<3x768xf32> to vector<1x768xf32>
    %15 = vector.broadcast %13 : vector<8x1xf32> to vector<8x768xf32>
    %16 = vector.broadcast %14 : vector<1x768xf32> to vector<8x768xf32>
    %17 = arith.mulf %15, %16 : vector<8x768xf32>
    %18 = arith.addf %12, %17 : vector<8x768xf32>
    %19 = vector.extract_strided_slice %2 {offsets = [0, 2], sizes = [8, 1], strides = [1, 1]} : vector<8x32xf32> to vector<8x1xf32>
    %20 = vector.extract_strided_slice %6 {offsets = [2, 0], sizes = [1, 768], strides = [1, 1]} : vector<3x768xf32> to vector<1x768xf32>
    %21 = vector.broadcast %19 : vector<8x1xf32> to vector<8x768xf32>
    %22 = vector.broadcast %20 : vector<1x768xf32> to vector<8x768xf32>
    %23 = arith.mulf %21, %22 : vector<8x768xf32>
    %24 = arith.addf %18, %23 : vector<8x768xf32>
    %25 = vector.extract_strided_slice %1 {offsets = [0, 1], sizes = [3, 768], strides = [1, 1]} : vector<3x896xf32> to vector<3x768xf32>
    %26 = vector.extract_strided_slice %2 {offsets = [0, 3], sizes = [8, 1], strides = [1, 1]} : vector<8x32xf32> to vector<8x1xf32>
    %27 = vector.extract_strided_slice %25 {offsets = [0, 0], sizes = [1, 768], strides = [1, 1]} : vector<3x768xf32> to vector<1x768xf32>
    %28 = vector.broadcast %26 : vector<8x1xf32> to vector<8x768xf32>
    %29 = vector.broadcast %27 : vector<1x768xf32> to vector<8x768xf32>
    %30 = arith.mulf %28, %29 : vector<8x768xf32>
    %31 = arith.addf %24, %30 : vector<8x768xf32>
    %32 = vector.extract_strided_slice %2 {offsets = [0, 4], sizes = [8, 1], strides = [1, 1]} : vector<8x32xf32> to vector<8x1xf32>
    %33 = vector.extract_strided_slice %25 {offsets = [1, 0], sizes = [1, 768], strides = [1, 1]} : vector<3x768xf32> to vector<1x768xf32>
    %34 = vector.broadcast %32 : vector<8x1xf32> to vector<8x768xf32>
    %35 = vector.broadcast %33 : vector<1x768xf32> to vector<8x768xf32>
    %36 = arith.mulf %34, %35 : vector<8x768xf32>
    %37 = arith.addf %31, %36 : vector<8x768xf32>
    %38 = vector.extract_strided_slice %2 {offsets = [0, 5], sizes = [8, 1], strides = [1, 1]} : vector<8x32xf32> to vector<8x1xf32>
    %39 = vector.extract_strided_slice %25 {offsets = [2, 0], sizes = [1, 768], strides = [1, 1]} : vector<3x768xf32> to vector<1x768xf32>
    %40 = vector.broadcast %38 : vector<8x1xf32> to vector<8x768xf32>
    %41 = vector.broadcast %39 : vector<1x768xf32> to vector<8x768xf32>
    %42 = arith.mulf %40, %41 : vector<8x768xf32>
    %43 = arith.addf %37, %42 : vector<8x768xf32>
    %44 = vector.extract_strided_slice %1 {offsets = [0, 2], sizes = [3, 768], strides = [1, 1]} : vector<3x896xf32> to vector<3x768xf32>
    %45 = vector.extract_strided_slice %2 {offsets = [0, 6], sizes = [8, 1], strides = [1, 1]} : vector<8x32xf32> to vector<8x1xf32>
    %46 = vector.extract_strided_slice %44 {offsets = [0, 0], sizes = [1, 768], strides = [1, 1]} : vector<3x768xf32> to vector<1x768xf32>
    %47 = vector.broadcast %45 : vector<8x1xf32> to vector<8x768xf32>
    %48 = vector.broadcast %46 : vector<1x768xf32> to vector<8x768xf32>
    %49 = arith.mulf %47, %48 : vector<8x768xf32>
    %50 = arith.addf %43, %49 : vector<8x768xf32>
    %51 = vector.extract_strided_slice %2 {offsets = [0, 7], sizes = [8, 1], strides = [1, 1]} : vector<8x32xf32> to vector<8x1xf32>
    %52 = vector.extract_strided_slice %44 {offsets = [1, 0], sizes = [1, 768], strides = [1, 1]} : vector<3x768xf32> to vector<1x768xf32>
    %53 = vector.broadcast %51 : vector<8x1xf32> to vector<8x768xf32>
    %54 = vector.broadcast %52 : vector<1x768xf32> to vector<8x768xf32>
    %55 = arith.mulf %53, %54 : vector<8x768xf32>
    %56 = arith.addf %50, %55 : vector<8x768xf32>
    %57 = vector.extract_strided_slice %2 {offsets = [0, 8], sizes = [8, 1], strides = [1, 1]} : vector<8x32xf32> to vector<8x1xf32>
    %58 = vector.extract_strided_slice %44 {offsets = [2, 0], sizes = [1, 768], strides = [1, 1]} : vector<3x768xf32> to vector<1x768xf32>
    %59 = vector.broadcast %57 : vector<8x1xf32> to vector<8x768xf32>
    %60 = vector.broadcast %58 : vector<1x768xf32> to vector<8x768xf32>
    %61 = arith.mulf %59, %60 : vector<8x768xf32>
    %62 = arith.addf %56, %61 : vector<8x768xf32>
    %63 = vector.extract_strided_slice %1 {offsets = [0, 16], sizes = [3, 768], strides = [1, 1]} : vector<3x896xf32> to vector<3x768xf32>
    %64 = vector.extract_strided_slice %2 {offsets = [0, 9], sizes = [8, 1], strides = [1, 1]} : vector<8x32xf32> to vector<8x1xf32>
    %65 = vector.extract_strided_slice %63 {offsets = [0, 0], sizes = [1, 768], strides = [1, 1]} : vector<3x768xf32> to vector<1x768xf32>
    %66 = vector.broadcast %64 : vector<8x1xf32> to vector<8x768xf32>
    %67 = vector.broadcast %65 : vector<1x768xf32> to vector<8x768xf32>
    %68 = arith.mulf %66, %67 : vector<8x768xf32>
    %69 = arith.addf %62, %68 : vector<8x768xf32>
    %70 = vector.extract_strided_slice %2 {offsets = [0, 10], sizes = [8, 1], strides = [1, 1]} : vector<8x32xf32> to vector<8x1xf32>
    %71 = vector.extract_strided_slice %63 {offsets = [1, 0], sizes = [1, 768], strides = [1, 1]} : vector<3x768xf32> to vector<1x768xf32>
    %72 = vector.broadcast %70 : vector<8x1xf32> to vector<8x768xf32>
    %73 = vector.broadcast %71 : vector<1x768xf32> to vector<8x768xf32>
    %74 = arith.mulf %72, %73 : vector<8x768xf32>
    %75 = arith.addf %69, %74 : vector<8x768xf32>
    %76 = vector.extract_strided_slice %2 {offsets = [0, 11], sizes = [8, 1], strides = [1, 1]} : vector<8x32xf32> to vector<8x1xf32>
    %77 = vector.extract_strided_slice %63 {offsets = [2, 0], sizes = [1, 768], strides = [1, 1]} : vector<3x768xf32> to vector<1x768xf32>
    %78 = vector.broadcast %76 : vector<8x1xf32> to vector<8x768xf32>
    %79 = vector.broadcast %77 : vector<1x768xf32> to vector<8x768xf32>
    %80 = arith.mulf %78, %79 : vector<8x768xf32>
    %81 = arith.addf %75, %80 : vector<8x768xf32>
    %82 = vector.extract_strided_slice %1 {offsets = [0, 17], sizes = [3, 768], strides = [1, 1]} : vector<3x896xf32> to vector<3x768xf32>
    %83 = vector.extract_strided_slice %2 {offsets = [0, 12], sizes = [8, 1], strides = [1, 1]} : vector<8x32xf32> to vector<8x1xf32>
    %84 = vector.extract_strided_slice %82 {offsets = [0, 0], sizes = [1, 768], strides = [1, 1]} : vector<3x768xf32> to vector<1x768xf32>
    %85 = vector.broadcast %83 : vector<8x1xf32> to vector<8x768xf32>
    %86 = vector.broadcast %84 : vector<1x768xf32> to vector<8x768xf32>
    %87 = arith.mulf %85, %86 : vector<8x768xf32>
    %88 = arith.addf %81, %87 : vector<8x768xf32>
    %89 = vector.extract_strided_slice %2 {offsets = [0, 13], sizes = [8, 1], strides = [1, 1]} : vector<8x32xf32> to vector<8x1xf32>
    %90 = vector.extract_strided_slice %82 {offsets = [1, 0], sizes = [1, 768], strides = [1, 1]} : vector<3x768xf32> to vector<1x768xf32>
    %91 = vector.broadcast %89 : vector<8x1xf32> to vector<8x768xf32>
    %92 = vector.broadcast %90 : vector<1x768xf32> to vector<8x768xf32>
    %93 = arith.mulf %91, %92 : vector<8x768xf32>
    %94 = arith.addf %88, %93 : vector<8x768xf32>
    %95 = vector.extract_strided_slice %2 {offsets = [0, 14], sizes = [8, 1], strides = [1, 1]} : vector<8x32xf32> to vector<8x1xf32>
    %96 = vector.extract_strided_slice %82 {offsets = [2, 0], sizes = [1, 768], strides = [1, 1]} : vector<3x768xf32> to vector<1x768xf32>
    %97 = vector.broadcast %95 : vector<8x1xf32> to vector<8x768xf32>
    %98 = vector.broadcast %96 : vector<1x768xf32> to vector<8x768xf32>
    %99 = arith.mulf %97, %98 : vector<8x768xf32>
    %100 = arith.addf %94, %99 : vector<8x768xf32>
    %101 = vector.extract_strided_slice %1 {offsets = [0, 18], sizes = [3, 768], strides = [1, 1]} : vector<3x896xf32> to vector<3x768xf32>
    %102 = vector.extract_strided_slice %2 {offsets = [0, 15], sizes = [8, 1], strides = [1, 1]} : vector<8x32xf32> to vector<8x1xf32>
    %103 = vector.extract_strided_slice %101 {offsets = [0, 0], sizes = [1, 768], strides = [1, 1]} : vector<3x768xf32> to vector<1x768xf32>
    %104 = vector.broadcast %102 : vector<8x1xf32> to vector<8x768xf32>
    %105 = vector.broadcast %103 : vector<1x768xf32> to vector<8x768xf32>
    %106 = arith.mulf %104, %105 : vector<8x768xf32>
    %107 = arith.addf %100, %106 : vector<8x768xf32>
    %108 = vector.extract_strided_slice %2 {offsets = [0, 16], sizes = [8, 1], strides = [1, 1]} : vector<8x32xf32> to vector<8x1xf32>
    %109 = vector.extract_strided_slice %101 {offsets = [1, 0], sizes = [1, 768], strides = [1, 1]} : vector<3x768xf32> to vector<1x768xf32>
    %110 = vector.broadcast %108 : vector<8x1xf32> to vector<8x768xf32>
    %111 = vector.broadcast %109 : vector<1x768xf32> to vector<8x768xf32>
    %112 = arith.mulf %110, %111 : vector<8x768xf32>
    %113 = arith.addf %107, %112 : vector<8x768xf32>
    %114 = vector.extract_strided_slice %2 {offsets = [0, 17], sizes = [8, 1], strides = [1, 1]} : vector<8x32xf32> to vector<8x1xf32>
    %115 = vector.extract_strided_slice %101 {offsets = [2, 0], sizes = [1, 768], strides = [1, 1]} : vector<3x768xf32> to vector<1x768xf32>
    %116 = vector.broadcast %114 : vector<8x1xf32> to vector<8x768xf32>
    %117 = vector.broadcast %115 : vector<1x768xf32> to vector<8x768xf32>
    %118 = arith.mulf %116, %117 : vector<8x768xf32>
    %119 = arith.addf %113, %118 : vector<8x768xf32>
    %120 = vector.extract_strided_slice %1 {offsets = [0, 32], sizes = [3, 768], strides = [1, 1]} : vector<3x896xf32> to vector<3x768xf32>
    %121 = vector.extract_strided_slice %2 {offsets = [0, 18], sizes = [8, 1], strides = [1, 1]} : vector<8x32xf32> to vector<8x1xf32>
    %122 = vector.extract_strided_slice %120 {offsets = [0, 0], sizes = [1, 768], strides = [1, 1]} : vector<3x768xf32> to vector<1x768xf32>
    %123 = vector.broadcast %121 : vector<8x1xf32> to vector<8x768xf32>
    %124 = vector.broadcast %122 : vector<1x768xf32> to vector<8x768xf32>
    %125 = arith.mulf %123, %124 : vector<8x768xf32>
    %126 = arith.addf %119, %125 : vector<8x768xf32>
    %127 = vector.extract_strided_slice %2 {offsets = [0, 19], sizes = [8, 1], strides = [1, 1]} : vector<8x32xf32> to vector<8x1xf32>
    %128 = vector.extract_strided_slice %120 {offsets = [1, 0], sizes = [1, 768], strides = [1, 1]} : vector<3x768xf32> to vector<1x768xf32>
    %129 = vector.broadcast %127 : vector<8x1xf32> to vector<8x768xf32>
    %130 = vector.broadcast %128 : vector<1x768xf32> to vector<8x768xf32>
    %131 = arith.mulf %129, %130 : vector<8x768xf32>
    %132 = arith.addf %126, %131 : vector<8x768xf32>
    %133 = vector.extract_strided_slice %2 {offsets = [0, 20], sizes = [8, 1], strides = [1, 1]} : vector<8x32xf32> to vector<8x1xf32>
    %134 = vector.extract_strided_slice %120 {offsets = [2, 0], sizes = [1, 768], strides = [1, 1]} : vector<3x768xf32> to vector<1x768xf32>
    %135 = vector.broadcast %133 : vector<8x1xf32> to vector<8x768xf32>
    %136 = vector.broadcast %134 : vector<1x768xf32> to vector<8x768xf32>
    %137 = arith.mulf %135, %136 : vector<8x768xf32>
    %138 = arith.addf %132, %137 : vector<8x768xf32>
    %139 = vector.extract_strided_slice %1 {offsets = [0, 33], sizes = [3, 768], strides = [1, 1]} : vector<3x896xf32> to vector<3x768xf32>
    %140 = vector.extract_strided_slice %2 {offsets = [0, 21], sizes = [8, 1], strides = [1, 1]} : vector<8x32xf32> to vector<8x1xf32>
    %141 = vector.extract_strided_slice %139 {offsets = [0, 0], sizes = [1, 768], strides = [1, 1]} : vector<3x768xf32> to vector<1x768xf32>
    %142 = vector.broadcast %140 : vector<8x1xf32> to vector<8x768xf32>
    %143 = vector.broadcast %141 : vector<1x768xf32> to vector<8x768xf32>
    %144 = arith.mulf %142, %143 : vector<8x768xf32>
    %145 = arith.addf %138, %144 : vector<8x768xf32>
    %146 = vector.extract_strided_slice %2 {offsets = [0, 22], sizes = [8, 1], strides = [1, 1]} : vector<8x32xf32> to vector<8x1xf32>
    %147 = vector.extract_strided_slice %139 {offsets = [1, 0], sizes = [1, 768], strides = [1, 1]} : vector<3x768xf32> to vector<1x768xf32>
    %148 = vector.broadcast %146 : vector<8x1xf32> to vector<8x768xf32>
    %149 = vector.broadcast %147 : vector<1x768xf32> to vector<8x768xf32>
    %150 = arith.mulf %148, %149 : vector<8x768xf32>
    %151 = arith.addf %145, %150 : vector<8x768xf32>
    %152 = vector.extract_strided_slice %2 {offsets = [0, 23], sizes = [8, 1], strides = [1, 1]} : vector<8x32xf32> to vector<8x1xf32>
    %153 = vector.extract_strided_slice %139 {offsets = [2, 0], sizes = [1, 768], strides = [1, 1]} : vector<3x768xf32> to vector<1x768xf32>
    %154 = vector.broadcast %152 : vector<8x1xf32> to vector<8x768xf32>
    %155 = vector.broadcast %153 : vector<1x768xf32> to vector<8x768xf32>
    %156 = arith.mulf %154, %155 : vector<8x768xf32>
    %157 = arith.addf %151, %156 : vector<8x768xf32>
    %158 = vector.extract_strided_slice %1 {offsets = [0, 34], sizes = [3, 768], strides = [1, 1]} : vector<3x896xf32> to vector<3x768xf32>
    %159 = vector.extract_strided_slice %2 {offsets = [0, 24], sizes = [8, 1], strides = [1, 1]} : vector<8x32xf32> to vector<8x1xf32>
    %160 = vector.extract_strided_slice %158 {offsets = [0, 0], sizes = [1, 768], strides = [1, 1]} : vector<3x768xf32> to vector<1x768xf32>
    %161 = vector.broadcast %159 : vector<8x1xf32> to vector<8x768xf32>
    %162 = vector.broadcast %160 : vector<1x768xf32> to vector<8x768xf32>
    %163 = arith.mulf %161, %162 : vector<8x768xf32>
    %164 = arith.addf %157, %163 : vector<8x768xf32>
    %165 = vector.extract_strided_slice %2 {offsets = [0, 25], sizes = [8, 1], strides = [1, 1]} : vector<8x32xf32> to vector<8x1xf32>
    %166 = vector.extract_strided_slice %158 {offsets = [1, 0], sizes = [1, 768], strides = [1, 1]} : vector<3x768xf32> to vector<1x768xf32>
    %167 = vector.broadcast %165 : vector<8x1xf32> to vector<8x768xf32>
    %168 = vector.broadcast %166 : vector<1x768xf32> to vector<8x768xf32>
    %169 = arith.mulf %167, %168 : vector<8x768xf32>
    %170 = arith.addf %164, %169 : vector<8x768xf32>
    %171 = vector.extract_strided_slice %2 {offsets = [0, 26], sizes = [8, 1], strides = [1, 1]} : vector<8x32xf32> to vector<8x1xf32>
    %172 = vector.extract_strided_slice %158 {offsets = [2, 0], sizes = [1, 768], strides = [1, 1]} : vector<3x768xf32> to vector<1x768xf32>
    %173 = vector.broadcast %171 : vector<8x1xf32> to vector<8x768xf32>
    %174 = vector.broadcast %172 : vector<1x768xf32> to vector<8x768xf32>
    %175 = arith.mulf %173, %174 : vector<8x768xf32>
    %176 = arith.addf %170, %175 : vector<8x768xf32>
    %c0_4 = arith.constant 0 : index
    %c0_5 = arith.constant 0 : index
    %c0_6 = arith.constant 0 : index
    %177 = vector.load %arg3[%c0_4, %c0_5, %c0_6] : memref<1x8x768xf32, #tpu.memory_space<vmem>>, vector<1x8x768xf32>
    %178 = vector.shape_cast %177 : vector<1x8x768xf32> to vector<8x768xf32>
    %179 = vector.shape_cast %176 : vector<8x768xf32> to vector<1x8x768xf32>
    tpu.vector_store %arg3[%c0_4, %c0_5, %c0_6], %179 {strides = array<i32>} : memref<1x8x768xf32, #tpu.memory_space<vmem>>, vector<1x8x768xf32>,
    return
  }
  func.func @transform_0(%arg0: i32) -> (i32, i32, i32) {
    %c0_i32 = arith.constant 0 : i32
    %c0_i32_0 = arith.constant 0 : i32
    %c0_i32_1 = arith.constant 0 : i32
    return %arg0, %c0_i32, %c0_i32_0 : i32, i32, i32
  }
  func.func @transform_1(%arg0: i32) -> (i32, i32) {
    %c0_i32 = arith.constant 0 : i32
    %c0_i32_0 = arith.constant 0 : i32
    %c0_i32_1 = arith.constant 0 : i32
    return %c0_i32, %c0_i32_0 : i32, i32
  }
  func.func @transform_2(%arg0: i32) -> (i32, i32, i32) {
    %c0_i32 = arith.constant 0 : i32
    %c0_i32_0 = arith.constant 0 : i32
    %c0_i32_1 = arith.constant 0 : i32
    return %arg0, %c0_i32, %c0_i32_0 : i32, i32, i32
  }
}

</mosaic_0001>

<llo_original>
// kernel: tpu_custom_call.1
$region0: #{tpu_custom_call.1}
  #allocation0 [shape = 'u32[]', space=smem, size = 0x4, offset = 0x4, fixed_abs, tag = 'smem constant byte address 0x4 - core index']
  #allocation1 [shape = 'u32[144,128]{1,0:T(1,128)}', space=vmem, size = 0x12000, scoped, tag = 'internal scratch']
  %s0 = inlined_call_operand.vmem [shape: f32[1,3,896], index: 0, kind: input, shape index: {}]
  %s1 = inlined_call_operand.vmem [shape: f32[8,32], index: 1, kind: input, shape index: {}]
  %s2 = inlined_call_operand.hbm [shape: f32[1,8,768], index: 2, kind: output, shape index: {}]
  %s3 = sld [smem:[#allocation0]]
  $region18: #{tpu_custom_call.1} parent=0
    _
  %s5 = ssub.s32 1, %s3
  %s6 = scalar_select 0, %s5, %s3
  $region1: #{tpu_custom_call.1} parent=0
    #allocation2 [shape = 'u8[24576]{0}', space=vmem, size = 0x6000, scoped, tag = 'output window, operand 0, single buffered']
    #allocation3 [shape = 's32[1]{0}', space=sflag, size = 0x4, scoped, tag = 'scoped memory for tpu_custom_call.1']
    %7 = vsyncpa [#allocation3], 0
    // Predicated region
    $region2: #{tpu_custom_call.1} parent=1 // pred_check
      _
    $region3: #{tpu_custom_call.1} parent=1 // pred_check_branch
      %9 = sbr.rel (0) target = $region5
    $region4: #{tpu_custom_call.1} parent=1 // pred_region
      _
    $region5: #{tpu_custom_call.1} parent=1 // pred_fallthru
      _
    // Predicated region
    $region6: #{tpu_custom_call.1} parent=1 // pred_check
      _
    $region7: #{tpu_custom_call.1} parent=1 // pred_check_branch
      %11 = sbr.rel (0) target = $region9
    $region8: #{tpu_custom_call.1} parent=1 // pred_region
      _
    $region9: #{tpu_custom_call.1} parent=1 // pred_fallthru
      _
    %v12 = vld [vmem:[%s0] sm:$0x77]
    %v13 = vld [vmem:[%s0 + $0x8] sm:$0x77]
    %v14 = vld [vmem:[%s0 + $0x10] sm:$0x77]
    %v15 = vld [vmem:[%s0 + $0x18] sm:$0x7]
    %v16 = vld [vmem:[%s1] sm:$0xff]
    %18 = vset.pattern.permute.xlu0 27
    %19 = vperm.xlu0 %18, %v16
    %v20 = vpop.permute.xlu0 %19
    %22 = vset.pattern.permute.xlu0 0
    %23 = vperm.xlu0 %22, %v16
    %v24 = vpop.permute.xlu0 %23
    %v29 = vlaneseq
    %v30 = vshrl.u32 %v29, 7
    %v31 = vsub.s32 0, %v30
    %v32 = vrot.slane %v12, %v31
    %v33 = vlaneseq
    %v34 = vshrl.u32 %v33, 7
    %v35 = vsub.s32 4, %v34
    %v36 = vrot.slane %v12, %v35
    %v37 = vlaneseq
    %v38 = vshrl.u32 %v37, 7
    %v39 = vsub.s32 0, %v38
    %v40 = vrot.slane %v13, %v39
    %v41 = vlaneseq
    %v42 = vshrl.u32 %v41, 7
    %v43 = vsub.s32 4, %v42
    %v44 = vrot.slane %v13, %v43
    %v45 = vlaneseq
    %v46 = vshrl.u32 %v45, 7
    %v47 = vsub.s32 0, %v46
    %v48 = vrot.slane %v14, %v47
    %v49 = vlaneseq
    %v50 = vshrl.u32 %v49, 7
    %v51 = vsub.s32 4, %v50
    %v52 = vrot.slane %v14, %v51
    %v59 = vlaneseq
    %v60 = vshrl.u32 %v59, 7
    %v61 = vsub.s32 0, %v60
    %v62 = vrot.slane %v32, %v61
    %v63 = vlaneseq
    %v64 = vshrl.u32 %v63, 7
    %v65 = vsub.s32 0, %v64
    %v66 = vrot.slane %v36, %v65
    %v67 = vlaneseq
    %v68 = vshrl.u32 %v67, 7
    %v69 = vsub.s32 0, %v68
    %v70 = vrot.slane %v40, %v69
    %v71 = vlaneseq
    %v72 = vshrl.u32 %v71, 7
    %v73 = vsub.s32 0, %v72
    %v74 = vrot.slane %v44, %v73
    %v75 = vlaneseq
    %v76 = vshrl.u32 %v75, 7
    %v77 = vsub.s32 0, %v76
    %v78 = vrot.slane %v48, %v77
    %v79 = vlaneseq
    %v80 = vshrl.u32 %v79, 7
    %v81 = vsub.s32 0, %v80
    %v82 = vrot.slane %v52, %v81
    %v83 = vmul.f32 %v24, %v62
    %v84 = vmul.f32 %v24, %v66
    %v85 = vmul.f32 %v24, %v70
    %v86 = vmul.f32 %v24, %v74
    %v87 = vmul.f32 %v24, %v78
    %v88 = vmul.f32 %v24, %v82
    %v89 = vadd.f32 %v20, %v83
    %v90 = vadd.f32 %v20, %v84
    %v91 = vadd.f32 %v20, %v85
    %v92 = vadd.f32 %v20, %v86
    %v93 = vadd.f32 %v20, %v87
    %v94 = vadd.f32 %v20, %v88
    %95 = vset.pattern.permute.xlu0 1
    %96 = vperm.xlu0 %95, %v16
    %v97 = vpop.permute.xlu0 %96
    %v99 = vlaneseq
    %v100 = vshrl.u32 %v99, 7
    %v101 = vsub.s32 1, %v100
    %v102 = vrot.slane %v12, %v101
    %v103 = vlaneseq
    %v104 = vshrl.u32 %v103, 7
    %v105 = vsub.s32 5, %v104
    %v106 = vrot.slane %v12, %v105
    %v107 = vlaneseq
    %v108 = vshrl.u32 %v107, 7
    %v109 = vsub.s32 1, %v108
    %v110 = vrot.slane %v13, %v109
    %v111 = vlaneseq
    %v112 = vshrl.u32 %v111, 7
    %v113 = vsub.s32 5, %v112
    %v114 = vrot.slane %v13, %v113
    %v115 = vlaneseq
    %v116 = vshrl.u32 %v115, 7
    %v117 = vsub.s32 1, %v116
    %v118 = vrot.slane %v14, %v117
    %v119 = vlaneseq
    %v120 = vshrl.u32 %v119, 7
    %v121 = vsub.s32 5, %v120
    %v122 = vrot.slane %v14, %v121
    %v129 = vlaneseq
    %v130 = vshrl.u32 %v129, 7
    %v131 = vsub.s32 1, %v130
    %v132 = vrot.slane %v102, %v131
    %v133 = vlaneseq
    %v134 = vshrl.u32 %v133, 7
    %v135 = vsub.s32 1, %v134
    %v136 = vrot.slane %v106, %v135
    %v137 = vlaneseq
    %v138 = vshrl.u32 %v137, 7
    %v139 = vsub.s32 1, %v138
    %v140 = vrot.slane %v110, %v139
    %v141 = vlaneseq
    %v142 = vshrl.u32 %v141, 7
    %v143 = vsub.s32 1, %v142
    %v144 = vrot.slane %v114, %v143
    %v145 = vlaneseq
    %v146 = vshrl.u32 %v145, 7
    %v147 = vsub.s32 1, %v146
    %v148 = vrot.slane %v118, %v147
    %v149 = vlaneseq
    %v150 = vshrl.u32 %v149, 7
    %v151 = vsub.s32 1, %v150
    %v152 = vrot.slane %v122, %v151
    %v153 = vmul.f32 %v97, %v132
    %v154 = vmul.f32 %v97, %v136
    %v155 = vmul.f32 %v97, %v140
    %v156 = vmul.f32 %v97, %v144
    %v157 = vmul.f32 %v97, %v148
    %v158 = vmul.f32 %v97, %v152
    %v159 = vadd.f32 %v89, %v153
    %v160 = vadd.f32 %v90, %v154
    %v161 = vadd.f32 %v91, %v155
    %v162 = vadd.f32 %v92, %v156
    %v163 = vadd.f32 %v93, %v157
    %v164 = vadd.f32 %v94, %v158
    %165 = vset.pattern.permute.xlu0 2
    %166 = vperm.xlu0 %165, %v16
    %v167 = vpop.permute.xlu0 %166
    %v169 = vlaneseq
    %v170 = vshrl.u32 %v169, 7
    %v171 = vsub.s32 2, %v170
    %v172 = vrot.slane %v12, %v171
    %v173 = vlaneseq
    %v174 = vshrl.u32 %v173, 7
    %v175 = vsub.s32 6, %v174
    %v176 = vrot.slane %v12, %v175
    %v177 = vlaneseq
    %v178 = vshrl.u32 %v177, 7
    %v179 = vsub.s32 2, %v178
    %v180 = vrot.slane %v13, %v179
    %v181 = vlaneseq
    %v182 = vshrl.u32 %v181, 7
    %v183 = vsub.s32 6, %v182
    %v184 = vrot.slane %v13, %v183
    %v185 = vlaneseq
    %v186 = vshrl.u32 %v185, 7
    %v187 = vsub.s32 2, %v186
    %v188 = vrot.slane %v14, %v187
    %v189 = vlaneseq
    %v190 = vshrl.u32 %v189, 7
    %v191 = vsub.s32 6, %v190
    %v192 = vrot.slane %v14, %v191
    %v199 = vlaneseq
    %v200 = vshrl.u32 %v199, 7
    %v201 = vsub.s32 2, %v200
    %v202 = vrot.slane %v172, %v201
    %v203 = vlaneseq
    %v204 = vshrl.u32 %v203, 7
    %v205 = vsub.s32 2, %v204
    %v206 = vrot.slane %v176, %v205
    %v207 = vlaneseq
    %v208 = vshrl.u32 %v207, 7
    %v209 = vsub.s32 2, %v208
    %v210 = vrot.slane %v180, %v209
    %v211 = vlaneseq
    %v212 = vshrl.u32 %v211, 7
    %v213 = vsub.s32 2, %v212
    %v214 = vrot.slane %v184, %v213
    %v215 = vlaneseq
    %v216 = vshrl.u32 %v215, 7
    %v217 = vsub.s32 2, %v216
    %v218 = vrot.slane %v188, %v217
    %v219 = vlaneseq
    %v220 = vshrl.u32 %v219, 7
    %v221 = vsub.s32 2, %v220
    %v222 = vrot.slane %v192, %v221
    %v223 = vmul.f32 %v167, %v202
    %v224 = vmul.f32 %v167, %v206
    %v225 = vmul.f32 %v167, %v210
    %v226 = vmul.f32 %v167, %v214
    %v227 = vmul.f32 %v167, %v218
    %v228 = vmul.f32 %v167, %v222
    %v229 = vadd.f32 %v159, %v223
    %v230 = vadd.f32 %v160, %v224
    %v231 = vadd.f32 %v161, %v225
    %v232 = vadd.f32 %v162, %v226
    %v233 = vadd.f32 %v163, %v227
    %v234 = vadd.f32 %v164, %v228
    %235 = vset.pattern.permute.xlu0 3
    %236 = vperm.xlu0 %235, %v16
    %v237 = vpop.permute.xlu0 %236
    %v240 = vlaneseq
    %v241 = vshrl.u32 %v240, 7
    %v242 = vsub.s32 0, %v241
    %v243 = vrot.slane %v15, %v242
    %v245 = vlaneseq
    %v246 = vshrl.u32 %v245, 7
    %v247 = vsub.s32 0, %v246
    %v248 = vrot.slane %v243, %v247
    %v249 = vmul.f32 %v237, %v62
    %v250 = vmul.f32 %v237, %v66
    %v251 = vmul.f32 %v237, %v70
    %v252 = vmul.f32 %v237, %v74
    %v253 = vmul.f32 %v237, %v78
    %v254 = vmul.f32 %v237, %v82
    %v255 = vmul.f32 %v237, %v248
    %263 = vrot.lane.b32.xlu0 %v249, 127
    %v264 = vpop.permute.xlu0 %263
    %265 = vrot.lane.b32.xlu0 %v250, 127
    %v266 = vpop.permute.xlu0 %265
    %267 = vrot.lane.b32.xlu0 %v251, 127
    %v268 = vpop.permute.xlu0 %267
    %269 = vrot.lane.b32.xlu0 %v252, 127
    %v270 = vpop.permute.xlu0 %269
    %271 = vrot.lane.b32.xlu0 %v253, 127
    %v272 = vpop.permute.xlu0 %271
    %273 = vrot.lane.b32.xlu0 %v254, 127
    %v274 = vpop.permute.xlu0 %273
    %275 = vrot.lane.b32.xlu0 %v255, 127
    %v276 = vpop.permute.xlu0 %275
    %vm277 = vcmask 1039360
    %v278 = vsel %vm277, %v264, %v266
    %v279 = vsel %vm277, %v266, %v268
    %v280 = vsel %vm277, %v268, %v270
    %v281 = vsel %vm277, %v270, %v272
    %v282 = vsel %vm277, %v272, %v274
    %v283 = vsel %vm277, %v274, %v276
    %v290 = vadd.f32 %v229, %v278
    %v291 = vadd.f32 %v230, %v279
    %v292 = vadd.f32 %v231, %v280
    %v293 = vadd.f32 %v232, %v281
    %v294 = vadd.f32 %v233, %v282
    %v295 = vadd.f32 %v234, %v283
    %296 = vset.pattern.permute.xlu0 4
    %297 = vperm.xlu0 %296, %v16
    %v298 = vpop.permute.xlu0 %297
    %v300 = vlaneseq
    %v301 = vshrl.u32 %v300, 7
    %v302 = vsub.s32 1, %v301
    %v303 = vrot.slane %v15, %v302
    %v305 = vlaneseq
    %v306 = vshrl.u32 %v305, 7
    %v307 = vsub.s32 1, %v306
    %v308 = vrot.slane %v303, %v307
    %v309 = vmul.f32 %v298, %v132
    %v310 = vmul.f32 %v298, %v136
    %v311 = vmul.f32 %v298, %v140
    %v312 = vmul.f32 %v298, %v144
    %v313 = vmul.f32 %v298, %v148
    %v314 = vmul.f32 %v298, %v152
    %v315 = vmul.f32 %v298, %v308
    %323 = vrot.lane.b32.xlu0 %v309, 127
    %v324 = vpop.permute.xlu0 %323
    %325 = vrot.lane.b32.xlu0 %v310, 127
    %v326 = vpop.permute.xlu0 %325
    %327 = vrot.lane.b32.xlu0 %v311, 127
    %v328 = vpop.permute.xlu0 %327
    %329 = vrot.lane.b32.xlu0 %v312, 127
    %v330 = vpop.permute.xlu0 %329
    %331 = vrot.lane.b32.xlu0 %v313, 127
    %v332 = vpop.permute.xlu0 %331
    %333 = vrot.lane.b32.xlu0 %v314, 127
    %v334 = vpop.permute.xlu0 %333
    %335 = vrot.lane.b32.xlu0 %v315, 127
    %v336 = vpop.permute.xlu0 %335
    %v337 = vsel %vm277, %v324, %v326
    %v338 = vsel %vm277, %v326, %v328
    %v339 = vsel %vm277, %v328, %v330
    %v340 = vsel %vm277, %v330, %v332
    %v341 = vsel %vm277, %v332, %v334
    %v342 = vsel %vm277, %v334, %v336
    %v349 = vadd.f32 %v290, %v337
    %v350 = vadd.f32 %v291, %v338
    %v351 = vadd.f32 %v292, %v339
    %v352 = vadd.f32 %v293, %v340
    %v353 = vadd.f32 %v294, %v341
    %v354 = vadd.f32 %v295, %v342
    %355 = vset.pattern.permute.xlu0 5
    %356 = vperm.xlu0 %355, %v16
    %v357 = vpop.permute.xlu0 %356
    %v359 = vlaneseq
    %v360 = vshrl.u32 %v359, 7
    %v361 = vsub.s32 2, %v360
    %v362 = vrot.slane %v15, %v361
    %v364 = vlaneseq
    %v365 = vshrl.u32 %v364, 7
    %v366 = vsub.s32 2, %v365
    %v367 = vrot.slane %v362, %v366
    %v368 = vmul.f32 %v357, %v202
    %v369 = vmul.f32 %v357, %v206
    %v370 = vmul.f32 %v357, %v210
    %v371 = vmul.f32 %v357, %v214
    %v372 = vmul.f32 %v357, %v218
    %v373 = vmul.f32 %v357, %v222
    %v374 = vmul.f32 %v357, %v367
    %382 = vrot.lane.b32.xlu0 %v368, 127
    %v383 = vpop.permute.xlu0 %382
    %384 = vrot.lane.b32.xlu0 %v369, 127
    %v385 = vpop.permute.xlu0 %384
    %386 = vrot.lane.b32.xlu0 %v370, 127
    %v387 = vpop.permute.xlu0 %386
    %388 = vrot.lane.b32.xlu0 %v371, 127
    %v389 = vpop.permute.xlu0 %388
    %390 = vrot.lane.b32.xlu0 %v372, 127
    %v391 = vpop.permute.xlu0 %390
    %392 = vrot.lane.b32.xlu0 %v373, 127
    %v393 = vpop.permute.xlu0 %392
    %394 = vrot.lane.b32.xlu0 %v374, 127
    %v395 = vpop.permute.xlu0 %394
    %v396 = vsel %vm277, %v383, %v385
    %v397 = vsel %vm277, %v385, %v387
    %v398 = vsel %vm277, %v387, %v389
    %v399 = vsel %vm277, %v389, %v391
    %v400 = vsel %vm277, %v391, %v393
    %v401 = vsel %vm277, %v393, %v395
    %v408 = vadd.f32 %v349, %v396
    %v409 = vadd.f32 %v350, %v397
    %v410 = vadd.f32 %v351, %v398
    %v411 = vadd.f32 %v352, %v399
    %v412 = vadd.f32 %v353, %v400
    %v413 = vadd.f32 %v354, %v401
    %414 = vset.pattern.permute.xlu0 6
    %415 = vperm.xlu0 %414, %v16
    %v416 = vpop.permute.xlu0 %415
    %v418 = vmul.f32 %v416, %v62
    %v419 = vmul.f32 %v416, %v66
    %v420 = vmul.f32 %v416, %v70
    %v421 = vmul.f32 %v416, %v74
    %v422 = vmul.f32 %v416, %v78
    %v423 = vmul.f32 %v416, %v82
    %v424 = vmul.f32 %v416, %v248
    %432 = vrot.lane.b32.xlu0 %v418, 126
    %v433 = vpop.permute.xlu0 %432
    %434 = vrot.lane.b32.xlu0 %v419, 126
    %v435 = vpop.permute.xlu0 %434
    %436 = vrot.lane.b32.xlu0 %v420, 126
    %v437 = vpop.permute.xlu0 %436
    %438 = vrot.lane.b32.xlu0 %v421, 126
    %v439 = vpop.permute.xlu0 %438
    %440 = vrot.lane.b32.xlu0 %v422, 126
    %v441 = vpop.permute.xlu0 %440
    %442 = vrot.lane.b32.xlu0 %v423, 126
    %v443 = vpop.permute.xlu0 %442
    %444 = vrot.lane.b32.xlu0 %v424, 126
    %v445 = vpop.permute.xlu0 %444
    %vm446 = vcmask 1031168
    %v447 = vsel %vm446, %v433, %v435
    %v448 = vsel %vm446, %v435, %v437
    %v449 = vsel %vm446, %v437, %v439
    %v450 = vsel %vm446, %v439, %v441
    %v451 = vsel %vm446, %v441, %v443
    %v452 = vsel %vm446, %v443, %v445
    %v459 = vadd.f32 %v408, %v447
    %v460 = vadd.f32 %v409, %v448
    %v461 = vadd.f32 %v410, %v449
    %v462 = vadd.f32 %v411, %v450
    %v463 = vadd.f32 %v412, %v451
    %v464 = vadd.f32 %v413, %v452
    %465 = vset.pattern.permute.xlu0 7
    %466 = vperm.xlu0 %465, %v16
    %v467 = vpop.permute.xlu0 %466
    %v469 = vmul.f32 %v467, %v132
    %v470 = vmul.f32 %v467, %v136
    %v471 = vmul.f32 %v467, %v140
    %v472 = vmul.f32 %v467, %v144
    %v473 = vmul.f32 %v467, %v148
    %v474 = vmul.f32 %v467, %v152
    %v475 = vmul.f32 %v467, %v308
    %483 = vrot.lane.b32.xlu0 %v469, 126
    %v484 = vpop.permute.xlu0 %483
    %485 = vrot.lane.b32.xlu0 %v470, 126
    %v486 = vpop.permute.xlu0 %485
    %487 = vrot.lane.b32.xlu0 %v471, 126
    %v488 = vpop.permute.xlu0 %487
    %489 = vrot.lane.b32.xlu0 %v472, 126
    %v490 = vpop.permute.xlu0 %489
    %491 = vrot.lane.b32.xlu0 %v473, 126
    %v492 = vpop.permute.xlu0 %491
    %493 = vrot.lane.b32.xlu0 %v474, 126
    %v494 = vpop.permute.xlu0 %493
    %495 = vrot.lane.b32.xlu0 %v475, 126
    %v496 = vpop.permute.xlu0 %495
    %v497 = vsel %vm446, %v484, %v486
    %v498 = vsel %vm446, %v486, %v488
    %v499 = vsel %vm446, %v488, %v490
    %v500 = vsel %vm446, %v490, %v492
    %v501 = vsel %vm446, %v492, %v494
    %v502 = vsel %vm446, %v494, %v496
    %v509 = vadd.f32 %v459, %v497
    %v510 = vadd.f32 %v460, %v498
    %v511 = vadd.f32 %v461, %v499
    %v512 = vadd.f32 %v462, %v500
    %v513 = vadd.f32 %v463, %v501
    %v514 = vadd.f32 %v464, %v502
    %515 = vset.pattern.permute.xlu0 8
    %516 = vperm.xlu0 %515, %v16
    %v517 = vpop.permute.xlu0 %516
    %v519 = vmul.f32 %v517, %v202
    %v520 = vmul.f32 %v517, %v206
    %v521 = vmul.f32 %v517, %v210
    %v522 = vmul.f32 %v517, %v214
    %v523 = vmul.f32 %v517, %v218
    %v524 = vmul.f32 %v517, %v222
    %v525 = vmul.f32 %v517, %v367
    %533 = vrot.lane.b32.xlu0 %v519, 126
    %v534 = vpop.permute.xlu0 %533
    %535 = vrot.lane.b32.xlu0 %v520, 126
    %v536 = vpop.permute.xlu0 %535
    %537 = vrot.lane.b32.xlu0 %v521, 126
    %v538 = vpop.permute.xlu0 %537
    %539 = vrot.lane.b32.xlu0 %v522, 126
    %v540 = vpop.permute.xlu0 %539
    %541 = vrot.lane.b32.xlu0 %v523, 126
    %v542 = vpop.permute.xlu0 %541
    %543 = vrot.lane.b32.xlu0 %v524, 126
    %v544 = vpop.permute.xlu0 %543
    %545 = vrot.lane.b32.xlu0 %v525, 126
    %v546 = vpop.permute.xlu0 %545
    %v547 = vsel %vm446, %v534, %v536
    %v548 = vsel %vm446, %v536, %v538
    %v549 = vsel %vm446, %v538, %v540
    %v550 = vsel %vm446, %v540, %v542
    %v551 = vsel %vm446, %v542, %v544
    %v552 = vsel %vm446, %v544, %v546
    %v559 = vadd.f32 %v509, %v547
    %v560 = vadd.f32 %v510, %v548
    %v561 = vadd.f32 %v511, %v549
    %v562 = vadd.f32 %v512, %v550
    %v563 = vadd.f32 %v513, %v551
    %v564 = vadd.f32 %v514, %v552
    %565 = vset.pattern.permute.xlu0 9
    %566 = vperm.xlu0 %565, %v16
    %v567 = vpop.permute.xlu0 %566
    %v569 = vmul.f32 %v567, %v62
    %v570 = vmul.f32 %v567, %v66
    %v571 = vmul.f32 %v567, %v70
    %v572 = vmul.f32 %v567, %v74
    %v573 = vmul.f32 %v567, %v78
    %v574 = vmul.f32 %v567, %v82
    %v575 = vmul.f32 %v567, %v248
    %583 = vrot.lane.b32.xlu0 %v569, 112
    %v584 = vpop.permute.xlu0 %583
    %585 = vrot.lane.b32.xlu0 %v570, 112
    %v586 = vpop.permute.xlu0 %585
    %587 = vrot.lane.b32.xlu0 %v571, 112
    %v588 = vpop.permute.xlu0 %587
    %589 = vrot.lane.b32.xlu0 %v572, 112
    %v590 = vpop.permute.xlu0 %589
    %591 = vrot.lane.b32.xlu0 %v573, 112
    %v592 = vpop.permute.xlu0 %591
    %593 = vrot.lane.b32.xlu0 %v574, 112
    %v594 = vpop.permute.xlu0 %593
    %595 = vrot.lane.b32.xlu0 %v575, 112
    %v596 = vpop.permute.xlu0 %595
    %vm597 = vcmask 916480
    %v598 = vsel %vm597, %v584, %v586
    %v599 = vsel %vm597, %v586, %v588
    %v600 = vsel %vm597, %v588, %v590
    %v601 = vsel %vm597, %v590, %v592
    %v602 = vsel %vm597, %v592, %v594
    %v603 = vsel %vm597, %v594, %v596
    %v610 = vadd.f32 %v559, %v598
    %v611 = vadd.f32 %v560, %v599
    %v612 = vadd.f32 %v561, %v600
    %v613 = vadd.f32 %v562, %v601
    %v614 = vadd.f32 %v563, %v602
    %v615 = vadd.f32 %v564, %v603
    %616 = vset.pattern.permute.xlu0 10
    %617 = vperm.xlu0 %616, %v16
    %v618 = vpop.permute.xlu0 %617
    %v620 = vmul.f32 %v618, %v132
    %v621 = vmul.f32 %v618, %v136
    %v622 = vmul.f32 %v618, %v140
    %v623 = vmul.f32 %v618, %v144
    %v624 = vmul.f32 %v618, %v148
    %v625 = vmul.f32 %v618, %v152
    %v626 = vmul.f32 %v618, %v308
    %634 = vrot.lane.b32.xlu0 %v620, 112
    %v635 = vpop.permute.xlu0 %634
    %636 = vrot.lane.b32.xlu0 %v621, 112
    %v637 = vpop.permute.xlu0 %636
    %638 = vrot.lane.b32.xlu0 %v622, 112
    %v639 = vpop.permute.xlu0 %638
    %640 = vrot.lane.b32.xlu0 %v623, 112
    %v641 = vpop.permute.xlu0 %640
    %642 = vrot.lane.b32.xlu0 %v624, 112
    %v643 = vpop.permute.xlu0 %642
    %644 = vrot.lane.b32.xlu0 %v625, 112
    %v645 = vpop.permute.xlu0 %644
    %646 = vrot.lane.b32.xlu0 %v626, 112
    %v647 = vpop.permute.xlu0 %646
    %v648 = vsel %vm597, %v635, %v637
    %v649 = vsel %vm597, %v637, %v639
    %v650 = vsel %vm597, %v639, %v641
    %v651 = vsel %vm597, %v641, %v643
    %v652 = vsel %vm597, %v643, %v645
    %v653 = vsel %vm597, %v645, %v647
    %v660 = vadd.f32 %v610, %v648
    %v661 = vadd.f32 %v611, %v649
    %v662 = vadd.f32 %v612, %v650
    %v663 = vadd.f32 %v613, %v651
    %v664 = vadd.f32 %v614, %v652
    %v665 = vadd.f32 %v615, %v653
    %666 = vset.pattern.permute.xlu0 11
    %667 = vperm.xlu0 %666, %v16
    %v668 = vpop.permute.xlu0 %667
    %v670 = vmul.f32 %v668, %v202
    %v671 = vmul.f32 %v668, %v206
    %v672 = vmul.f32 %v668, %v210
    %v673 = vmul.f32 %v668, %v214
    %v674 = vmul.f32 %v668, %v218
    %v675 = vmul.f32 %v668, %v222
    %v676 = vmul.f32 %v668, %v367
    %684 = vrot.lane.b32.xlu0 %v670, 112
    %v685 = vpop.permute.xlu0 %684
    %686 = vrot.lane.b32.xlu0 %v671, 112
    %v687 = vpop.permute.xlu0 %686
    %688 = vrot.lane.b32.xlu0 %v672, 112
    %v689 = vpop.permute.xlu0 %688
    %690 = vrot.lane.b32.xlu0 %v673, 112
    %v691 = vpop.permute.xlu0 %690
    %692 = vrot.lane.b32.xlu0 %v674, 112
    %v693 = vpop.permute.xlu0 %692
    %694 = vrot.lane.b32.xlu0 %v675, 112
    %v695 = vpop.permute.xlu0 %694
    %696 = vrot.lane.b32.xlu0 %v676, 112
    %v697 = vpop.permute.xlu0 %696
    %v698 = vsel %vm597, %v685, %v687
    %v699 = vsel %vm597, %v687, %v689
    %v700 = vsel %vm597, %v689, %v691
    %v701 = vsel %vm597, %v691, %v693
    %v702 = vsel %vm597, %v693, %v695
    %v703 = vsel %vm597, %v695, %v697
    %v710 = vadd.f32 %v660, %v698
    %v711 = vadd.f32 %v661, %v699
    %v712 = vadd.f32 %v662, %v700
    %v713 = vadd.f32 %v663, %v701
    %v714 = vadd.f32 %v664, %v702
    %v715 = vadd.f32 %v665, %v703
    %716 = vset.pattern.permute.xlu0 12
    %717 = vperm.xlu0 %716, %v16
    %v718 = vpop.permute.xlu0 %717
    %v720 = vmul.f32 %v718, %v62
    %v721 = vmul.f32 %v718, %v66
    %v722 = vmul.f32 %v718, %v70
    %v723 = vmul.f32 %v718, %v74
    %v724 = vmul.f32 %v718, %v78
    %v725 = vmul.f32 %v718, %v82
    %v726 = vmul.f32 %v718, %v248
    %734 = vrot.lane.b32.xlu0 %v720, 111
    %v735 = vpop.permute.xlu0 %734
    %736 = vrot.lane.b32.xlu0 %v721, 111
    %v737 = vpop.permute.xlu0 %736
    %738 = vrot.lane.b32.xlu0 %v722, 111
    %v739 = vpop.permute.xlu0 %738
    %740 = vrot.lane.b32.xlu0 %v723, 111
    %v741 = vpop.permute.xlu0 %740
    %742 = vrot.lane.b32.xlu0 %v724, 111
    %v743 = vpop.permute.xlu0 %742
    %744 = vrot.lane.b32.xlu0 %v725, 111
    %v745 = vpop.permute.xlu0 %744
    %746 = vrot.lane.b32.xlu0 %v726, 111
    %v747 = vpop.permute.xlu0 %746
    %vm748 = vcmask 908288
    %v749 = vsel %vm748, %v735, %v737
    %v750 = vsel %vm748, %v737, %v739
    %v751 = vsel %vm748, %v739, %v741
    %v752 = vsel %vm748, %v741, %v743
    %v753 = vsel %vm748, %v743, %v745
    %v754 = vsel %vm748, %v745, %v747
    %v761 = vadd.f32 %v710, %v749
    %v762 = vadd.f32 %v711, %v750
    %v763 = vadd.f32 %v712, %v751
    %v764 = vadd.f32 %v713, %v752
    %v765 = vadd.f32 %v714, %v753
    %v766 = vadd.f32 %v715, %v754
    %767 = vset.pattern.permute.xlu0 13
    %768 = vperm.xlu0 %767, %v16
    %v769 = vpop.permute.xlu0 %768
    %v771 = vmul.f32 %v769, %v132
    %v772 = vmul.f32 %v769, %v136
    %v773 = vmul.f32 %v769, %v140
    %v774 = vmul.f32 %v769, %v144
    %v775 = vmul.f32 %v769, %v148
    %v776 = vmul.f32 %v769, %v152
    %v777 = vmul.f32 %v769, %v308
    %785 = vrot.lane.b32.xlu0 %v771, 111
    %v786 = vpop.permute.xlu0 %785
    %787 = vrot.lane.b32.xlu0 %v772, 111
    %v788 = vpop.permute.xlu0 %787
    %789 = vrot.lane.b32.xlu0 %v773, 111
    %v790 = vpop.permute.xlu0 %789
    %791 = vrot.lane.b32.xlu0 %v774, 111
    %v792 = vpop.permute.xlu0 %791
    %793 = vrot.lane.b32.xlu0 %v775, 111
    %v794 = vpop.permute.xlu0 %793
    %795 = vrot.lane.b32.xlu0 %v776, 111
    %v796 = vpop.permute.xlu0 %795
    %797 = vrot.lane.b32.xlu0 %v777, 111
    %v798 = vpop.permute.xlu0 %797
    %v799 = vsel %vm748, %v786, %v788
    %v800 = vsel %vm748, %v788, %v790
    %v801 = vsel %vm748, %v790, %v792
    %v802 = vsel %vm748, %v792, %v794
    %v803 = vsel %vm748, %v794, %v796
    %v804 = vsel %vm748, %v796, %v798
    %v811 = vadd.f32 %v761, %v799
    %v812 = vadd.f32 %v762, %v800
    %v813 = vadd.f32 %v763, %v801
    %v814 = vadd.f32 %v764, %v802
    %v815 = vadd.f32 %v765, %v803
    %v816 = vadd.f32 %v766, %v804
    %817 = vset.pattern.permute.xlu0 14
    %818 = vperm.xlu0 %817, %v16
    %v819 = vpop.permute.xlu0 %818
    %v821 = vmul.f32 %v819, %v202
    %v822 = vmul.f32 %v819, %v206
    %v823 = vmul.f32 %v819, %v210
    %v824 = vmul.f32 %v819, %v214
    %v825 = vmul.f32 %v819, %v218
    %v826 = vmul.f32 %v819, %v222
    %v827 = vmul.f32 %v819, %v367
    %835 = vrot.lane.b32.xlu0 %v821, 111
    %v836 = vpop.permute.xlu0 %835
    %837 = vrot.lane.b32.xlu0 %v822, 111
    %v838 = vpop.permute.xlu0 %837
    %839 = vrot.lane.b32.xlu0 %v823, 111
    %v840 = vpop.permute.xlu0 %839
    %841 = vrot.lane.b32.xlu0 %v824, 111
    %v842 = vpop.permute.xlu0 %841
    %843 = vrot.lane.b32.xlu0 %v825, 111
    %v844 = vpop.permute.xlu0 %843
    %845 = vrot.lane.b32.xlu0 %v826, 111
    %v846 = vpop.permute.xlu0 %845
    %847 = vrot.lane.b32.xlu0 %v827, 111
    %v848 = vpop.permute.xlu0 %847
    %v849 = vsel %vm748, %v836, %v838
    %v850 = vsel %vm748, %v838, %v840
    %v851 = vsel %vm748, %v840, %v842
    %v852 = vsel %vm748, %v842, %v844
    %v853 = vsel %vm748, %v844, %v846
    %v854 = vsel %vm748, %v846, %v848
    %v861 = vadd.f32 %v811, %v849
    %v862 = vadd.f32 %v812, %v850
    %v863 = vadd.f32 %v813, %v851
    %v864 = vadd.f32 %v814, %v852
    %v865 = vadd.f32 %v815, %v853
    %v866 = vadd.f32 %v816, %v854
    %867 = vset.pattern.permute.xlu0 15
    %868 = vperm.xlu0 %867, %v16
    %v869 = vpop.permute.xlu0 %868
    %v871 = vmul.f32 %v869, %v62
    %v872 = vmul.f32 %v869, %v66
    %v873 = vmul.f32 %v869, %v70
    %v874 = vmul.f32 %v869, %v74
    %v875 = vmul.f32 %v869, %v78
    %v876 = vmul.f32 %v869, %v82
    %v877 = vmul.f32 %v869, %v248
    %885 = vrot.lane.b32.xlu0 %v871, 110
    %v886 = vpop.permute.xlu0 %885
    %887 = vrot.lane.b32.xlu0 %v872, 110
    %v888 = vpop.permute.xlu0 %887
    %889 = vrot.lane.b32.xlu0 %v873, 110
    %v890 = vpop.permute.xlu0 %889
    %891 = vrot.lane.b32.xlu0 %v874, 110
    %v892 = vpop.permute.xlu0 %891
    %893 = vrot.lane.b32.xlu0 %v875, 110
    %v894 = vpop.permute.xlu0 %893
    %895 = vrot.lane.b32.xlu0 %v876, 110
    %v896 = vpop.permute.xlu0 %895
    %897 = vrot.lane.b32.xlu0 %v877, 110
    %v898 = vpop.permute.xlu0 %897
    %vm899 = vcmask 900096
    %v900 = vsel %vm899, %v886, %v888
    %v901 = vsel %vm899, %v888, %v890
    %v902 = vsel %vm899, %v890, %v892
    %v903 = vsel %vm899, %v892, %v894
    %v904 = vsel %vm899, %v894, %v896
    %v905 = vsel %vm899, %v896, %v898
    %v912 = vadd.f32 %v861, %v900
    %v913 = vadd.f32 %v862, %v901
    %v914 = vadd.f32 %v863, %v902
    %v915 = vadd.f32 %v864, %v903
    %v916 = vadd.f32 %v865, %v904
    %v917 = vadd.f32 %v866, %v905
    %918 = vset.pattern.permute.xlu0 16
    %919 = vperm.xlu0 %918, %v16
    %v920 = vpop.permute.xlu0 %919
    %v922 = vmul.f32 %v920, %v132
    %v923 = vmul.f32 %v920, %v136
    %v924 = vmul.f32 %v920, %v140
    %v925 = vmul.f32 %v920, %v144
    %v926 = vmul.f32 %v920, %v148
    %v927 = vmul.f32 %v920, %v152
    %v928 = vmul.f32 %v920, %v308
    %936 = vrot.lane.b32.xlu0 %v922, 110
    %v937 = vpop.permute.xlu0 %936
    %938 = vrot.lane.b32.xlu0 %v923, 110
    %v939 = vpop.permute.xlu0 %938
    %940 = vrot.lane.b32.xlu0 %v924, 110
    %v941 = vpop.permute.xlu0 %940
    %942 = vrot.lane.b32.xlu0 %v925, 110
    %v943 = vpop.permute.xlu0 %942
    %944 = vrot.lane.b32.xlu0 %v926, 110
    %v945 = vpop.permute.xlu0 %944
    %946 = vrot.lane.b32.xlu0 %v927, 110
    %v947 = vpop.permute.xlu0 %946
    %948 = vrot.lane.b32.xlu0 %v928, 110
    %v949 = vpop.permute.xlu0 %948
    %v950 = vsel %vm899, %v937, %v939
    %v951 = vsel %vm899, %v939, %v941
    %v952 = vsel %vm899, %v941, %v943
    %v953 = vsel %vm899, %v943, %v945
    %v954 = vsel %vm899, %v945, %v947
    %v955 = vsel %vm899, %v947, %v949
    %v962 = vadd.f32 %v912, %v950
    %v963 = vadd.f32 %v913, %v951
    %v964 = vadd.f32 %v914, %v952
    %v965 = vadd.f32 %v915, %v953
    %v966 = vadd.f32 %v916, %v954
    %v967 = vadd.f32 %v917, %v955
    %968 = vset.pattern.permute.xlu0 17
    %969 = vperm.xlu0 %968, %v16
    %v970 = vpop.permute.xlu0 %969
    %v972 = vmul.f32 %v970, %v202
    %v973 = vmul.f32 %v970, %v206
    %v974 = vmul.f32 %v970, %v210
    %v975 = vmul.f32 %v970, %v214
    %v976 = vmul.f32 %v970, %v218
    %v977 = vmul.f32 %v970, %v222
    %v978 = vmul.f32 %v970, %v367
    %986 = vrot.lane.b32.xlu0 %v972, 110
    %v987 = vpop.permute.xlu0 %986
    %988 = vrot.lane.b32.xlu0 %v973, 110
    %v989 = vpop.permute.xlu0 %988
    %990 = vrot.lane.b32.xlu0 %v974, 110
    %v991 = vpop.permute.xlu0 %990
    %992 = vrot.lane.b32.xlu0 %v975, 110
    %v993 = vpop.permute.xlu0 %992
    %994 = vrot.lane.b32.xlu0 %v976, 110
    %v995 = vpop.permute.xlu0 %994
    %996 = vrot.lane.b32.xlu0 %v977, 110
    %v997 = vpop.permute.xlu0 %996
    %998 = vrot.lane.b32.xlu0 %v978, 110
    %v999 = vpop.permute.xlu0 %998
    %v1000 = vsel %vm899, %v987, %v989
    %v1001 = vsel %vm899, %v989, %v991
    %v1002 = vsel %vm899, %v991, %v993
    %v1003 = vsel %vm899, %v993, %v995
    %v1004 = vsel %vm899, %v995, %v997
    %v1005 = vsel %vm899, %v997, %v999
    %v1012 = vadd.f32 %v962, %v1000
    %v1013 = vadd.f32 %v963, %v1001
    %v1014 = vadd.f32 %v964, %v1002
    %v1015 = vadd.f32 %v965, %v1003
    %v1016 = vadd.f32 %v966, %v1004
    %v1017 = vadd.f32 %v967, %v1005
    %1018 = vset.pattern.permute.xlu0 18
    %1019 = vperm.xlu0 %1018, %v16
    %v1020 = vpop.permute.xlu0 %1019
    %v1022 = vmul.f32 %v1020, %v62
    %v1023 = vmul.f32 %v1020, %v66
    %v1024 = vmul.f32 %v1020, %v70
    %v1025 = vmul.f32 %v1020, %v74
    %v1026 = vmul.f32 %v1020, %v78
    %v1027 = vmul.f32 %v1020, %v82
    %v1028 = vmul.f32 %v1020, %v248
    %1036 = vrot.lane.b32.xlu0 %v1022, 96
    %v1037 = vpop.permute.xlu0 %1036
    %1038 = vrot.lane.b32.xlu0 %v1023, 96
    %v1039 = vpop.permute.xlu0 %1038
    %1040 = vrot.lane.b32.xlu0 %v1024, 96
    %v1041 = vpop.permute.xlu0 %1040
    %1042 = vrot.lane.b32.xlu0 %v1025, 96
    %v1043 = vpop.permute.xlu0 %1042
    %1044 = vrot.lane.b32.xlu0 %v1026, 96
    %v1045 = vpop.permute.xlu0 %1044
    %1046 = vrot.lane.b32.xlu0 %v1027, 96
    %v1047 = vpop.permute.xlu0 %1046
    %1048 = vrot.lane.b32.xlu0 %v1028, 96
    %v1049 = vpop.permute.xlu0 %1048
    %vm1050 = vcmask 785408
    %v1051 = vsel %vm1050, %v1037, %v1039
    %v1052 = vsel %vm1050, %v1039, %v1041
    %v1053 = vsel %vm1050, %v1041, %v1043
    %v1054 = vsel %vm1050, %v1043, %v1045
    %v1055 = vsel %vm1050, %v1045, %v1047
    %v1056 = vsel %vm1050, %v1047, %v1049
    %v1063 = vadd.f32 %v1012, %v1051
    %v1064 = vadd.f32 %v1013, %v1052
    %v1065 = vadd.f32 %v1014, %v1053
    %v1066 = vadd.f32 %v1015, %v1054
    %v1067 = vadd.f32 %v1016, %v1055
    %v1068 = vadd.f32 %v1017, %v1056
    %1069 = vset.pattern.permute.xlu0 19
    %1070 = vperm.xlu0 %1069, %v16
    %v1071 = vpop.permute.xlu0 %1070
    %v1073 = vmul.f32 %v1071, %v132
    %v1074 = vmul.f32 %v1071, %v136
    %v1075 = vmul.f32 %v1071, %v140
    %v1076 = vmul.f32 %v1071, %v144
    %v1077 = vmul.f32 %v1071, %v148
    %v1078 = vmul.f32 %v1071, %v152
    %v1079 = vmul.f32 %v1071, %v308
    %1087 = vrot.lane.b32.xlu0 %v1073, 96
    %v1088 = vpop.permute.xlu0 %1087
    %1089 = vrot.lane.b32.xlu0 %v1074, 96
    %v1090 = vpop.permute.xlu0 %1089
    %1091 = vrot.lane.b32.xlu0 %v1075, 96
    %v1092 = vpop.permute.xlu0 %1091
    %1093 = vrot.lane.b32.xlu0 %v1076, 96
    %v1094 = vpop.permute.xlu0 %1093
    %1095 = vrot.lane.b32.xlu0 %v1077, 96
    %v1096 = vpop.permute.xlu0 %1095
    %1097 = vrot.lane.b32.xlu0 %v1078, 96
    %v1098 = vpop.permute.xlu0 %1097
    %1099 = vrot.lane.b32.xlu0 %v1079, 96
    %v1100 = vpop.permute.xlu0 %1099
    %v1101 = vsel %vm1050, %v1088, %v1090
    %v1102 = vsel %vm1050, %v1090, %v1092
    %v1103 = vsel %vm1050, %v1092, %v1094
    %v1104 = vsel %vm1050, %v1094, %v1096
    %v1105 = vsel %vm1050, %v1096, %v1098
    %v1106 = vsel %vm1050, %v1098, %v1100
    %v1113 = vadd.f32 %v1063, %v1101
    %v1114 = vadd.f32 %v1064, %v1102
    %v1115 = vadd.f32 %v1065, %v1103
    %v1116 = vadd.f32 %v1066, %v1104
    %v1117 = vadd.f32 %v1067, %v1105
    %v1118 = vadd.f32 %v1068, %v1106
    %1119 = vset.pattern.permute.xlu0 20
    %1120 = vperm.xlu0 %1119, %v16
    %v1121 = vpop.permute.xlu0 %1120
    %v1123 = vmul.f32 %v1121, %v202
    %v1124 = vmul.f32 %v1121, %v206
    %v1125 = vmul.f32 %v1121, %v210
    %v1126 = vmul.f32 %v1121, %v214
    %v1127 = vmul.f32 %v1121, %v218
    %v1128 = vmul.f32 %v1121, %v222
    %v1129 = vmul.f32 %v1121, %v367
    %1137 = vrot.lane.b32.xlu0 %v1123, 96
    %v1138 = vpop.permute.xlu0 %1137
    %1139 = vrot.lane.b32.xlu0 %v1124, 96
    %v1140 = vpop.permute.xlu0 %1139
    %1141 = vrot.lane.b32.xlu0 %v1125, 96
    %v1142 = vpop.permute.xlu0 %1141
    %1143 = vrot.lane.b32.xlu0 %v1126, 96
    %v1144 = vpop.permute.xlu0 %1143
    %1145 = vrot.lane.b32.xlu0 %v1127, 96
    %v1146 = vpop.permute.xlu0 %1145
    %1147 = vrot.lane.b32.xlu0 %v1128, 96
    %v1148 = vpop.permute.xlu0 %1147
    %1149 = vrot.lane.b32.xlu0 %v1129, 96
    %v1150 = vpop.permute.xlu0 %1149
    %v1151 = vsel %vm1050, %v1138, %v1140
    %v1152 = vsel %vm1050, %v1140, %v1142
    %v1153 = vsel %vm1050, %v1142, %v1144
    %v1154 = vsel %vm1050, %v1144, %v1146
    %v1155 = vsel %vm1050, %v1146, %v1148
    %v1156 = vsel %vm1050, %v1148, %v1150
    %v1163 = vadd.f32 %v1113, %v1151
    %v1164 = vadd.f32 %v1114, %v1152
    %v1165 = vadd.f32 %v1115, %v1153
    %v1166 = vadd.f32 %v1116, %v1154
    %v1167 = vadd.f32 %v1117, %v1155
    %v1168 = vadd.f32 %v1118, %v1156
    %1169 = vset.pattern.permute.xlu0 21
    %1170 = vperm.xlu0 %1169, %v16
    %v1171 = vpop.permute.xlu0 %1170
    %v1173 = vmul.f32 %v1171, %v62
    %v1174 = vmul.f32 %v1171, %v66
    %v1175 = vmul.f32 %v1171, %v70
    %v1176 = vmul.f32 %v1171, %v74
    %v1177 = vmul.f32 %v1171, %v78
    %v1178 = vmul.f32 %v1171, %v82
    %v1179 = vmul.f32 %v1171, %v248
    %1187 = vrot.lane.b32.xlu0 %v1173, 95
    %v1188 = vpop.permute.xlu0 %1187
    %1189 = vrot.lane.b32.xlu0 %v1174, 95
    %v1190 = vpop.permute.xlu0 %1189
    %1191 = vrot.lane.b32.xlu0 %v1175, 95
    %v1192 = vpop.permute.xlu0 %1191
    %1193 = vrot.lane.b32.xlu0 %v1176, 95
    %v1194 = vpop.permute.xlu0 %1193
    %1195 = vrot.lane.b32.xlu0 %v1177, 95
    %v1196 = vpop.permute.xlu0 %1195
    %1197 = vrot.lane.b32.xlu0 %v1178, 95
    %v1198 = vpop.permute.xlu0 %1197
    %1199 = vrot.lane.b32.xlu0 %v1179, 95
    %v1200 = vpop.permute.xlu0 %1199
    %vm1201 = vcmask 777216
    %v1202 = vsel %vm1201, %v1188, %v1190
    %v1203 = vsel %vm1201, %v1190, %v1192
    %v1204 = vsel %vm1201, %v1192, %v1194
    %v1205 = vsel %vm1201, %v1194, %v1196
    %v1206 = vsel %vm1201, %v1196, %v1198
    %v1207 = vsel %vm1201, %v1198, %v1200
    %v1214 = vadd.f32 %v1163, %v1202
    %v1215 = vadd.f32 %v1164, %v1203
    %v1216 = vadd.f32 %v1165, %v1204
    %v1217 = vadd.f32 %v1166, %v1205
    %v1218 = vadd.f32 %v1167, %v1206
    %v1219 = vadd.f32 %v1168, %v1207
    %1220 = vset.pattern.permute.xlu0 22
    %1221 = vperm.xlu0 %1220, %v16
    %v1222 = vpop.permute.xlu0 %1221
    %v1224 = vmul.f32 %v1222, %v132
    %v1225 = vmul.f32 %v1222, %v136
    %v1226 = vmul.f32 %v1222, %v140
    %v1227 = vmul.f32 %v1222, %v144
    %v1228 = vmul.f32 %v1222, %v148
    %v1229 = vmul.f32 %v1222, %v152
    %v1230 = vmul.f32 %v1222, %v308
    %1238 = vrot.lane.b32.xlu0 %v1224, 95
    %v1239 = vpop.permute.xlu0 %1238
    %1240 = vrot.lane.b32.xlu0 %v1225, 95
    %v1241 = vpop.permute.xlu0 %1240
    %1242 = vrot.lane.b32.xlu0 %v1226, 95
    %v1243 = vpop.permute.xlu0 %1242
    %1244 = vrot.lane.b32.xlu0 %v1227, 95
    %v1245 = vpop.permute.xlu0 %1244
    %1246 = vrot.lane.b32.xlu0 %v1228, 95
    %v1247 = vpop.permute.xlu0 %1246
    %1248 = vrot.lane.b32.xlu0 %v1229, 95
    %v1249 = vpop.permute.xlu0 %1248
    %1250 = vrot.lane.b32.xlu0 %v1230, 95
    %v1251 = vpop.permute.xlu0 %1250
    %v1252 = vsel %vm1201, %v1239, %v1241
    %v1253 = vsel %vm1201, %v1241, %v1243
    %v1254 = vsel %vm1201, %v1243, %v1245
    %v1255 = vsel %vm1201, %v1245, %v1247
    %v1256 = vsel %vm1201, %v1247, %v1249
    %v1257 = vsel %vm1201, %v1249, %v1251
    %v1264 = vadd.f32 %v1214, %v1252
    %v1265 = vadd.f32 %v1215, %v1253
    %v1266 = vadd.f32 %v1216, %v1254
    %v1267 = vadd.f32 %v1217, %v1255
    %v1268 = vadd.f32 %v1218, %v1256
    %v1269 = vadd.f32 %v1219, %v1257
    %1270 = vset.pattern.permute.xlu0 23
    %1271 = vperm.xlu0 %1270, %v16
    %v1272 = vpop.permute.xlu0 %1271
    %v1274 = vmul.f32 %v1272, %v202
    %v1275 = vmul.f32 %v1272, %v206
    %v1276 = vmul.f32 %v1272, %v210
    %v1277 = vmul.f32 %v1272, %v214
    %v1278 = vmul.f32 %v1272, %v218
    %v1279 = vmul.f32 %v1272, %v222
    %v1280 = vmul.f32 %v1272, %v367
    %1288 = vrot.lane.b32.xlu0 %v1274, 95
    %v1289 = vpop.permute.xlu0 %1288
    %1290 = vrot.lane.b32.xlu0 %v1275, 95
    %v1291 = vpop.permute.xlu0 %1290
    %1292 = vrot.lane.b32.xlu0 %v1276, 95
    %v1293 = vpop.permute.xlu0 %1292
    %1294 = vrot.lane.b32.xlu0 %v1277, 95
    %v1295 = vpop.permute.xlu0 %1294
    %1296 = vrot.lane.b32.xlu0 %v1278, 95
    %v1297 = vpop.permute.xlu0 %1296
    %1298 = vrot.lane.b32.xlu0 %v1279, 95
    %v1299 = vpop.permute.xlu0 %1298
    %1300 = vrot.lane.b32.xlu0 %v1280, 95
    %v1301 = vpop.permute.xlu0 %1300
    %v1302 = vsel %vm1201, %v1289, %v1291
    %v1303 = vsel %vm1201, %v1291, %v1293
    %v1304 = vsel %vm1201, %v1293, %v1295
    %v1305 = vsel %vm1201, %v1295, %v1297
    %v1306 = vsel %vm1201, %v1297, %v1299
    %v1307 = vsel %vm1201, %v1299, %v1301
    %v1314 = vadd.f32 %v1264, %v1302
    %v1315 = vadd.f32 %v1265, %v1303
    %v1316 = vadd.f32 %v1266, %v1304
    %v1317 = vadd.f32 %v1267, %v1305
    %v1318 = vadd.f32 %v1268, %v1306
    %v1319 = vadd.f32 %v1269, %v1307
    %1320 = vset.pattern.permute.xlu0 24
    %1321 = vperm.xlu0 %1320, %v16
    %v1322 = vpop.permute.xlu0 %1321
    %v1324 = vmul.f32 %v1322, %v62
    %v1325 = vmul.f32 %v1322, %v66
    %v1326 = vmul.f32 %v1322, %v70
    %v1327 = vmul.f32 %v1322, %v74
    %v1328 = vmul.f32 %v1322, %v78
    %v1329 = vmul.f32 %v1322, %v82
    %v1330 = vmul.f32 %v1322, %v248
    %1338 = vrot.lane.b32.xlu0 %v1324, 94
    %v1339 = vpop.permute.xlu0 %1338
    %1340 = vrot.lane.b32.xlu0 %v1325, 94
    %v1341 = vpop.permute.xlu0 %1340
    %1342 = vrot.lane.b32.xlu0 %v1326, 94
    %v1343 = vpop.permute.xlu0 %1342
    %1344 = vrot.lane.b32.xlu0 %v1327, 94
    %v1345 = vpop.permute.xlu0 %1344
    %1346 = vrot.lane.b32.xlu0 %v1328, 94
    %v1347 = vpop.permute.xlu0 %1346
    %1348 = vrot.lane.b32.xlu0 %v1329, 94
    %v1349 = vpop.permute.xlu0 %1348
    %1350 = vrot.lane.b32.xlu0 %v1330, 94
    %v1351 = vpop.permute.xlu0 %1350
    %vm1352 = vcmask 769024
    %v1353 = vsel %vm1352, %v1339, %v1341
    %v1354 = vsel %vm1352, %v1341, %v1343
    %v1355 = vsel %vm1352, %v1343, %v1345
    %v1356 = vsel %vm1352, %v1345, %v1347
    %v1357 = vsel %vm1352, %v1347, %v1349
    %v1358 = vsel %vm1352, %v1349, %v1351
    %v1365 = vadd.f32 %v1314, %v1353
    %v1366 = vadd.f32 %v1315, %v1354
    %v1367 = vadd.f32 %v1316, %v1355
    %v1368 = vadd.f32 %v1317, %v1356
    %v1369 = vadd.f32 %v1318, %v1357
    %v1370 = vadd.f32 %v1319, %v1358
    %1371 = vset.pattern.permute.xlu0 25
    %1372 = vperm.xlu0 %1371, %v16
    %v1373 = vpop.permute.xlu0 %1372
    %v1375 = vmul.f32 %v1373, %v132
    %v1376 = vmul.f32 %v1373, %v136
    %v1377 = vmul.f32 %v1373, %v140
    %v1378 = vmul.f32 %v1373, %v144
    %v1379 = vmul.f32 %v1373, %v148
    %v1380 = vmul.f32 %v1373, %v152
    %v1381 = vmul.f32 %v1373, %v308
    %1389 = vrot.lane.b32.xlu0 %v1375, 94
    %v1390 = vpop.permute.xlu0 %1389
    %1391 = vrot.lane.b32.xlu0 %v1376, 94
    %v1392 = vpop.permute.xlu0 %1391
    %1393 = vrot.lane.b32.xlu0 %v1377, 94
    %v1394 = vpop.permute.xlu0 %1393
    %1395 = vrot.lane.b32.xlu0 %v1378, 94
    %v1396 = vpop.permute.xlu0 %1395
    %1397 = vrot.lane.b32.xlu0 %v1379, 94
    %v1398 = vpop.permute.xlu0 %1397
    %1399 = vrot.lane.b32.xlu0 %v1380, 94
    %v1400 = vpop.permute.xlu0 %1399
    %1401 = vrot.lane.b32.xlu0 %v1381, 94
    %v1402 = vpop.permute.xlu0 %1401
    %v1403 = vsel %vm1352, %v1390, %v1392
    %v1404 = vsel %vm1352, %v1392, %v1394
    %v1405 = vsel %vm1352, %v1394, %v1396
    %v1406 = vsel %vm1352, %v1396, %v1398
    %v1407 = vsel %vm1352, %v1398, %v1400
    %v1408 = vsel %vm1352, %v1400, %v1402
    %v1415 = vadd.f32 %v1365, %v1403
    %v1416 = vadd.f32 %v1366, %v1404
    %v1417 = vadd.f32 %v1367, %v1405
    %v1418 = vadd.f32 %v1368, %v1406
    %v1419 = vadd.f32 %v1369, %v1407
    %v1420 = vadd.f32 %v1370, %v1408
    %1421 = vset.pattern.permute.xlu0 26
    %1422 = vperm.xlu0 %1421, %v16
    %v1423 = vpop.permute.xlu0 %1422
    %v1425 = vmul.f32 %v1423, %v202
    %v1426 = vmul.f32 %v1423, %v206
    %v1427 = vmul.f32 %v1423, %v210
    %v1428 = vmul.f32 %v1423, %v214
    %v1429 = vmul.f32 %v1423, %v218
    %v1430 = vmul.f32 %v1423, %v222
    %v1431 = vmul.f32 %v1423, %v367
    %1439 = vrot.lane.b32.xlu0 %v1425, 94
    %v1440 = vpop.permute.xlu0 %1439
    %1441 = vrot.lane.b32.xlu0 %v1426, 94
    %v1442 = vpop.permute.xlu0 %1441
    %1443 = vrot.lane.b32.xlu0 %v1427, 94
    %v1444 = vpop.permute.xlu0 %1443
    %1445 = vrot.lane.b32.xlu0 %v1428, 94
    %v1446 = vpop.permute.xlu0 %1445
    %1447 = vrot.lane.b32.xlu0 %v1429, 94
    %v1448 = vpop.permute.xlu0 %1447
    %1449 = vrot.lane.b32.xlu0 %v1430, 94
    %v1450 = vpop.permute.xlu0 %1449
    %1451 = vrot.lane.b32.xlu0 %v1431, 94
    %v1452 = vpop.permute.xlu0 %1451
    %v1453 = vsel %vm1352, %v1440, %v1442
    %v1454 = vsel %vm1352, %v1442, %v1444
    %v1455 = vsel %vm1352, %v1444, %v1446
    %v1456 = vsel %vm1352, %v1446, %v1448
    %v1457 = vsel %vm1352, %v1448, %v1450
    %v1458 = vsel %vm1352, %v1450, %v1452
    %v1465 = vadd.f32 %v1415, %v1453
    %v1466 = vadd.f32 %v1416, %v1454
    %v1467 = vadd.f32 %v1417, %v1455
    %v1468 = vadd.f32 %v1418, %v1456
    %v1469 = vadd.f32 %v1419, %v1457
    %v1470 = vadd.f32 %v1420, %v1458
    %1471 = vst [vmem:[#allocation2] sm:$0xff] %v1465
    %1472 = vst [vmem:[#allocation2 + $0x8] sm:$0xff] %v1466
    %1473 = vst [vmem:[#allocation2 + $0x10] sm:$0xff] %v1467
    %1474 = vst [vmem:[#allocation2 + $0x18] sm:$0xff] %v1468
    %1475 = vst [vmem:[#allocation2 + $0x20] sm:$0xff] %v1469
    %1476 = vst [vmem:[#allocation2 + $0x28] sm:$0xff] %v1470
    // Predicated region
    $region10: #{tpu_custom_call.1} parent=1 // pred_check
      _
    $region11: #{tpu_custom_call.1} parent=1 // pred_check_branch
      %1478 = sbr.rel (0) target = $region13
    $region12: #{tpu_custom_call.1} parent=1 // pred_region
      %s1480 = ssub.s32 768, 768
      %1481 = vsyncadd [#allocation3], %s1480
      %s1483 = sshll.u32 [#allocation2], 4
      %s1484 = int_to_ptr.vmem [resolvable:$true] %s1483
      %1486 = dma.vmem_to_hbm [thread:$0]  %s1484, 768, %s2, [#allocation3]
    $region13: #{tpu_custom_call.1} parent=1 // pred_fallthru
      _
    // Predicated region
    $region14: #{tpu_custom_call.1} parent=1 // pred_check
      _
    $region15: #{tpu_custom_call.1} parent=1 // pred_check_branch
      %1488 = sbr.rel (0) target = $region17
    $region16: #{tpu_custom_call.1} parent=1 // pred_region
      %1489 = dma.done [#allocation3], 768
    $region17: #{tpu_custom_call.1} parent=1 // pred_fallthru
      _
    %1490 = vsyncpa [#allocation3], 1

</llo_original>
